<compile_context>
chip_gen: v5e
topology: v5e:2x2
jax: 0.10.0
libtpu: 0.0.40
codegen_flags: <defaults>
</compile_context>

<pallas_src>
import jax
import jax.numpy as jnp
from jax.experimental import pallas as pl
from jax.experimental.pallas import tpu as pltpu


_LANES = 128
# Conservative budgets that work across v5e / v6e / v7x without touching
# vmem_limit_bytes (double-buffered in+out blocks must fit the scoped limit).
_VMEM_BUDGET_BYTES = 12 * 1024 * 1024
_TRAFFIC_TARGET_BYTES = 8 * 1024 * 1024


def _conv1x1_kernel(w_ref, b_ref, x_ref, o_ref):
    # w_ref: SMEM (C_out * C_in,) flattened weights
    # b_ref: SMEM (C_out,)
    # x_ref: VMEM (N, C_in, R, 128)   -- dense (R, 128) full-vreg slabs
    # o_ref: VMEM (N, C_out, R, 128)
    n, c_in = x_ref.shape[0], x_ref.shape[1]
    c_out = o_ref.shape[1]

    for b in range(n):              # static unroll: N, C_in, C_out are tiny
        for co in range(c_out):
            acc = x_ref[b, 0].astype(jnp.float32) * w_ref[co * c_in + 0]
            for ci in range(1, c_in):
                acc = acc + x_ref[b, ci].astype(jnp.float32) * w_ref[co * c_in + ci]
            # Direct row store — no concatenate / sublane pack.
            o_ref[b, co] = (acc + b_ref[co]).astype(o_ref.dtype)


def _choose_row_tile(n_rows, n, c_in, c_out, dtype_bytes):
    """Rows of 128 lanes per grid step: big (multi-MiB) but VMEM-safe."""
    bytes_per_row = n * (c_in + c_out) * _LANES * dtype_bytes  # in + out traffic
    r_vmem = _VMEM_BUDGET_BYTES // max(2 * bytes_per_row, 1)   # double-buffered
    r_traffic = _TRAFFIC_TARGET_BYTES // max(bytes_per_row, 1)
    r = min(r_vmem, r_traffic)
    r = max((r // 8) * 8, 8)        # sublane-tiled dim must be a multiple of 8
    if r >= n_rows:
        return n_rows               # full extent: single grid step, always legal
    return r


def conv2d_1x1(x_nchw, weight, bias):
    """1x1 conv. x_nchw: (N, C_in, H, W); weight: (C_out, C_in, 1, 1); bias: (C_out,)."""
    N, C_in, H, W = x_nchw.shape
    C_out = weight.shape[0]
    HW = H * W
    dtype_bytes = jnp.dtype(x_nchw.dtype).itemsize

    # Lane-dense layout: pad HW up to a multiple of 128 (avoids masked vst.msk
    # on lane-sparse output blocks), then view as 128-lane rows.
    HW_pad = ((HW + _LANES - 1) // _LANES) * _LANES
    x_flat = x_nchw.reshape(N, C_in, HW)
    if HW_pad != HW:
        x_flat = jnp.pad(x_flat, ((0, 0), (0, 0), (0, HW_pad - HW)))
    n_rows = HW_pad // _LANES
    x4 = x_flat.reshape(N, C_in, n_rows, _LANES)

    w_flat = weight.reshape(C_out * C_in)   # SMEM scalars
    b_flat = bias.reshape(C_out)            # SMEM scalars

    R = _choose_row_tile(n_rows, N, C_in, C_out, dtype_bytes)
    n_tiles = pl.cdiv(n_rows, R)            # partial last tile handled by masking
    grid = (n_tiles,)

    out4 = pl.pallas_call(
        _conv1x1_kernel,
        out_shape=jax.ShapeDtypeStruct((N, C_out, n_rows, _LANES), x_nchw.dtype),
        grid_spec=pltpu.PrefetchScalarGridSpec(
            num_scalar_prefetch=0,
            grid=grid,
            in_specs=[
                # Tiny parameters live in SMEM: no per-step VMEM double-buffering.
                pl.BlockSpec(memory_space=pltpu.MemorySpace.SMEM),
                pl.BlockSpec(memory_space=pltpu.MemorySpace.SMEM),
                # Whole batch + all input channels per step; tile over row groups.
                pl.BlockSpec((N, C_in, R, _LANES), lambda t: (0, 0, t, 0)),
            ],
            out_specs=pl.BlockSpec((N, C_out, R, _LANES), lambda t: (0, 0, t, 0)),
        ),
        compiler_params=pltpu.CompilerParams(
            dimension_semantics=("parallel",),
        ),
    )(w_flat, b_flat, x4)

    out = out4.reshape(N, C_out, HW_pad)
    if HW_pad != HW:
        out = out[:, :, :HW]
    return out.reshape(N, C_out, H, W)


def _ref_conv2d_1x1(x_nchw, weight, bias):
    # Pure-JAX reference mirroring nn.Conv2d(kernel_size=(1,1)).
    w = weight.reshape(weight.shape[0], weight.shape[1])  # (C_out, C_in)
    y = jnp.einsum("nchw,oc->nohw", x_nchw, w)
    return y + bias.reshape(1, -1, 1, 1)


if __name__ == "__main__":
    # Module config: Conv2d1x1(input_channels=4, reduction_factor=2)
    input_channels = 4
    reduction_factor = 2
    out_channels = input_channels // reduction_factor  # 2

    N, H, W = 2, 16, 16

    key = jax.random.PRNGKey(0)
    kx, kw, kb = jax.random.split(key, 3)

    x = jax.random.normal(kx, (N, input_channels, H, W), dtype=jnp.float32)

    # Deterministic parameter init (PyTorch-like uniform bounds for a 1x1 conv).
    fan_in = input_channels  # kernel_size = 1x1
    bound = 1.0 / (fan_in ** 0.5)
    weight = jax.random.uniform(
        kw, (out_channels, input_channels, 1, 1),
        minval=-bound, maxval=bound, dtype=jnp.float32)
    bias = jax.random.uniform(
        kb, (out_channels,), minval=-bound, maxval=bound, dtype=jnp.float32)

    y = conv2d_1x1(x, weight, bias)
    y = jax.block_until_ready(y)

    y_ref = _ref_conv2d_1x1(x, weight, bias)
    assert y.shape == (N, out_channels, H, W), y.shape
    assert jnp.allclose(y, y_ref, atol=1e-5, rtol=1e-5), "mismatch vs reference"

    print("KERNEL_OK")
</pallas_src>

<mosaic_0001>
module attributes {stable_mosaic.version = 11 : i64} {
  func.func @_conv1x1_kernel(%arg0: i32, %arg1: memref<8xf32, #tpu.memory_space<smem>>, %arg2: memref<2xf32, #tpu.memory_space<smem>>, %arg3: memref<2x4x2x128xf32, #tpu.memory_space<vmem>>, %arg4: memref<2x2x2x128xf32, #tpu.memory_space<vmem>>) attributes {dimension_semantics = [#tpu.dimension_semantics<parallel>], iteration_bounds = array<i64: 1>, scalar_prefetch = 0 : i64, scratch_operands = 0 : i64, tpu.core_type = #tpu.core_type<tc>, window_params = [{transform_indices = @transform_0, window_bounds = array<i64: 8>}, {transform_indices = @transform_1, window_bounds = array<i64: 2>}, {transform_indices = @transform_2, window_bounds = array<i64: 2, 4, 2, 128>}, {transform_indices = @transform_3, window_bounds = array<i64: 2, 2, 2, 128>}]} {
    %c0 = arith.constant 0 : index
    %c0_0 = arith.constant 0 : index
    %c0_1 = arith.constant 0 : index
    %c0_2 = arith.constant 0 : index
    %0 = vector.load %arg3[%c0, %c0_0, %c0_1, %c0_2] : memref<2x4x2x128xf32, #tpu.memory_space<vmem>>, vector<1x1x2x128xf32>
    %1 = vector.shape_cast %0 : vector<1x1x2x128xf32> to vector<2x128xf32>
    %c0_3 = arith.constant 0 : index
    %2 = memref.load %arg1[%c0_3] : memref<8xf32, #tpu.memory_space<smem>>
    %3 = vector.broadcast %2 : f32 to vector<2x128xf32>
    %4 = arith.mulf %1, %3 : vector<2x128xf32>
    %c0_4 = arith.constant 0 : index
    %c1 = arith.constant 1 : index
    %c0_5 = arith.constant 0 : index
    %c0_6 = arith.constant 0 : index
    %5 = vector.load %arg3[%c0_4, %c1, %c0_5, %c0_6] : memref<2x4x2x128xf32, #tpu.memory_space<vmem>>, vector<1x1x2x128xf32>
    %6 = vector.shape_cast %5 : vector<1x1x2x128xf32> to vector<2x128xf32>
    %c1_7 = arith.constant 1 : index
    %7 = memref.load %arg1[%c1_7] : memref<8xf32, #tpu.memory_space<smem>>
    %8 = vector.broadcast %7 : f32 to vector<2x128xf32>
    %9 = arith.mulf %6, %8 : vector<2x128xf32>
    %10 = arith.addf %4, %9 : vector<2x128xf32>
    %c0_8 = arith.constant 0 : index
    %c2 = arith.constant 2 : index
    %c0_9 = arith.constant 0 : index
    %c0_10 = arith.constant 0 : index
    %11 = vector.load %arg3[%c0_8, %c2, %c0_9, %c0_10] : memref<2x4x2x128xf32, #tpu.memory_space<vmem>>, vector<1x1x2x128xf32>
    %12 = vector.shape_cast %11 : vector<1x1x2x128xf32> to vector<2x128xf32>
    %c2_11 = arith.constant 2 : index
    %13 = memref.load %arg1[%c2_11] : memref<8xf32, #tpu.memory_space<smem>>
    %14 = vector.broadcast %13 : f32 to vector<2x128xf32>
    %15 = arith.mulf %12, %14 : vector<2x128xf32>
    %16 = arith.addf %10, %15 : vector<2x128xf32>
    %c0_12 = arith.constant 0 : index
    %c3 = arith.constant 3 : index
    %c0_13 = arith.constant 0 : index
    %c0_14 = arith.constant 0 : index
    %17 = vector.load %arg3[%c0_12, %c3, %c0_13, %c0_14] : memref<2x4x2x128xf32, #tpu.memory_space<vmem>>, vector<1x1x2x128xf32>
    %18 = vector.shape_cast %17 : vector<1x1x2x128xf32> to vector<2x128xf32>
    %c3_15 = arith.constant 3 : index
    %19 = memref.load %arg1[%c3_15] : memref<8xf32, #tpu.memory_space<smem>>
    %20 = vector.broadcast %19 : f32 to vector<2x128xf32>
    %21 = arith.mulf %18, %20 : vector<2x128xf32>
    %22 = arith.addf %16, %21 : vector<2x128xf32>
    %c0_16 = arith.constant 0 : index
    %23 = memref.load %arg2[%c0_16] : memref<2xf32, #tpu.memory_space<smem>>
    %24 = vector.broadcast %23 : f32 to vector<2x128xf32>
    %25 = arith.addf %22, %24 : vector<2x128xf32>
    %c0_17 = arith.constant 0 : index
    %c0_18 = arith.constant 0 : index
    %c0_19 = arith.constant 0 : index
    %c0_20 = arith.constant 0 : index
    %26 = vector.load %arg4[%c0_17, %c0_18, %c0_19, %c0_20] : memref<2x2x2x128xf32, #tpu.memory_space<vmem>>, vector<1x1x2x128xf32>
    %27 = vector.shape_cast %26 : vector<1x1x2x128xf32> to vector<2x128xf32>
    %28 = vector.shape_cast %25 : vector<2x128xf32> to vector<1x1x2x128xf32>
    tpu.vector_store %arg4[%c0_17, %c0_18, %c0_19, %c0_20], %28 {strides = array<i32>} : memref<2x2x2x128xf32, #tpu.memory_space<vmem>>, vector<1x1x2x128xf32>,
    %c0_21 = arith.constant 0 : index
    %c0_22 = arith.constant 0 : index
    %c0_23 = arith.constant 0 : index
    %c0_24 = arith.constant 0 : index
    %29 = vector.load %arg3[%c0_21, %c0_22, %c0_23, %c0_24] : memref<2x4x2x128xf32, #tpu.memory_space<vmem>>, vector<1x1x2x128xf32>
    %30 = vector.shape_cast %29 : vector<1x1x2x128xf32> to vector<2x128xf32>
    %c4 = arith.constant 4 : index
    %31 = memref.load %arg1[%c4] : memref<8xf32, #tpu.memory_space<smem>>
    %32 = vector.broadcast %31 : f32 to vector<2x128xf32>
    %33 = arith.mulf %30, %32 : vector<2x128xf32>
    %c0_25 = arith.constant 0 : index
    %c1_26 = arith.constant 1 : index
    %c0_27 = arith.constant 0 : index
    %c0_28 = arith.constant 0 : index
    %34 = vector.load %arg3[%c0_25, %c1_26, %c0_27, %c0_28] : memref<2x4x2x128xf32, #tpu.memory_space<vmem>>, vector<1x1x2x128xf32>
    %35 = vector.shape_cast %34 : vector<1x1x2x128xf32> to vector<2x128xf32>
    %c5 = arith.constant 5 : index
    %36 = memref.load %arg1[%c5] : memref<8xf32, #tpu.memory_space<smem>>
    %37 = vector.broadcast %36 : f32 to vector<2x128xf32>
    %38 = arith.mulf %35, %37 : vector<2x128xf32>
    %39 = arith.addf %33, %38 : vector<2x128xf32>
    %c0_29 = arith.constant 0 : index
    %c2_30 = arith.constant 2 : index
    %c0_31 = arith.constant 0 : index
    %c0_32 = arith.constant 0 : index
    %40 = vector.load %arg3[%c0_29, %c2_30, %c0_31, %c0_32] : memref<2x4x2x128xf32, #tpu.memory_space<vmem>>, vector<1x1x2x128xf32>
    %41 = vector.shape_cast %40 : vector<1x1x2x128xf32> to vector<2x128xf32>
    %c6 = arith.constant 6 : index
    %42 = memref.load %arg1[%c6] : memref<8xf32, #tpu.memory_space<smem>>
    %43 = vector.broadcast %42 : f32 to vector<2x128xf32>
    %44 = arith.mulf %41, %43 : vector<2x128xf32>
    %45 = arith.addf %39, %44 : vector<2x128xf32>
    %c0_33 = arith.constant 0 : index
    %c3_34 = arith.constant 3 : index
    %c0_35 = arith.constant 0 : index
    %c0_36 = arith.constant 0 : index
    %46 = vector.load %arg3[%c0_33, %c3_34, %c0_35, %c0_36] : memref<2x4x2x128xf32, #tpu.memory_space<vmem>>, vector<1x1x2x128xf32>
    %47 = vector.shape_cast %46 : vector<1x1x2x128xf32> to vector<2x128xf32>
    %c7 = arith.constant 7 : index
    %48 = memref.load %arg1[%c7] : memref<8xf32, #tpu.memory_space<smem>>
    %49 = vector.broadcast %48 : f32 to vector<2x128xf32>
    %50 = arith.mulf %47, %49 : vector<2x128xf32>
    %51 = arith.addf %45, %50 : vector<2x128xf32>
    %c1_37 = arith.constant 1 : index
    %52 = memref.load %arg2[%c1_37] : memref<2xf32, #tpu.memory_space<smem>>
    %53 = vector.broadcast %52 : f32 to vector<2x128xf32>
    %54 = arith.addf %51, %53 : vector<2x128xf32>
    %c0_38 = arith.constant 0 : index
    %c1_39 = arith.constant 1 : index
    %c0_40 = arith.constant 0 : index
    %c0_41 = arith.constant 0 : index
    %55 = vector.load %arg4[%c0_38, %c1_39, %c0_40, %c0_41] : memref<2x2x2x128xf32, #tpu.memory_space<vmem>>, vector<1x1x2x128xf32>
    %56 = vector.shape_cast %55 : vector<1x1x2x128xf32> to vector<2x128xf32>
    %57 = vector.shape_cast %54 : vector<2x128xf32> to vector<1x1x2x128xf32>
    tpu.vector_store %arg4[%c0_38, %c1_39, %c0_40, %c0_41], %57 {strides = array<i32>} : memref<2x2x2x128xf32, #tpu.memory_space<vmem>>, vector<1x1x2x128xf32>,
    %c1_42 = arith.constant 1 : index
    %c0_43 = arith.constant 0 : index
    %c0_44 = arith.constant 0 : index
    %c0_45 = arith.constant 0 : index
    %58 = vector.load %arg3[%c1_42, %c0_43, %c0_44, %c0_45] : memref<2x4x2x128xf32, #tpu.memory_space<vmem>>, vector<1x1x2x128xf32>
    %59 = vector.shape_cast %58 : vector<1x1x2x128xf32> to vector<2x128xf32>
    %c0_46 = arith.constant 0 : index
    %60 = memref.load %arg1[%c0_46] : memref<8xf32, #tpu.memory_space<smem>>
    %61 = vector.broadcast %60 : f32 to vector<2x128xf32>
    %62 = arith.mulf %59, %61 : vector<2x128xf32>
    %c1_47 = arith.constant 1 : index
    %c1_48 = arith.constant 1 : index
    %c0_49 = arith.constant 0 : index
    %c0_50 = arith.constant 0 : index
    %63 = vector.load %arg3[%c1_47, %c1_48, %c0_49, %c0_50] : memref<2x4x2x128xf32, #tpu.memory_space<vmem>>, vector<1x1x2x128xf32>
    %64 = vector.shape_cast %63 : vector<1x1x2x128xf32> to vector<2x128xf32>
    %c1_51 = arith.constant 1 : index
    %65 = memref.load %arg1[%c1_51] : memref<8xf32, #tpu.memory_space<smem>>
    %66 = vector.broadcast %65 : f32 to vector<2x128xf32>
    %67 = arith.mulf %64, %66 : vector<2x128xf32>
    %68 = arith.addf %62, %67 : vector<2x128xf32>
    %c1_52 = arith.constant 1 : index
    %c2_53 = arith.constant 2 : index
    %c0_54 = arith.constant 0 : index
    %c0_55 = arith.constant 0 : index
    %69 = vector.load %arg3[%c1_52, %c2_53, %c0_54, %c0_55] : memref<2x4x2x128xf32, #tpu.memory_space<vmem>>, vector<1x1x2x128xf32>
    %70 = vector.shape_cast %69 : vector<1x1x2x128xf32> to vector<2x128xf32>
    %c2_56 = arith.constant 2 : index
    %71 = memref.load %arg1[%c2_56] : memref<8xf32, #tpu.memory_space<smem>>
    %72 = vector.broadcast %71 : f32 to vector<2x128xf32>
    %73 = arith.mulf %70, %72 : vector<2x128xf32>
    %74 = arith.addf %68, %73 : vector<2x128xf32>
    %c1_57 = arith.constant 1 : index
    %c3_58 = arith.constant 3 : index
    %c0_59 = arith.constant 0 : index
    %c0_60 = arith.constant 0 : index
    %75 = vector.load %arg3[%c1_57, %c3_58, %c0_59, %c0_60] : memref<2x4x2x128xf32, #tpu.memory_space<vmem>>, vector<1x1x2x128xf32>
    %76 = vector.shape_cast %75 : vector<1x1x2x128xf32> to vector<2x128xf32>
    %c3_61 = arith.constant 3 : index
    %77 = memref.load %arg1[%c3_61] : memref<8xf32, #tpu.memory_space<smem>>
    %78 = vector.broadcast %77 : f32 to vector<2x128xf32>
    %79 = arith.mulf %76, %78 : vector<2x128xf32>
    %80 = arith.addf %74, %79 : vector<2x128xf32>
    %c0_62 = arith.constant 0 : index
    %81 = memref.load %arg2[%c0_62] : memref<2xf32, #tpu.memory_space<smem>>
    %82 = vector.broadcast %81 : f32 to vector<2x128xf32>
    %83 = arith.addf %80, %82 : vector<2x128xf32>
    %c1_63 = arith.constant 1 : index
    %c0_64 = arith.constant 0 : index
    %c0_65 = arith.constant 0 : index
    %c0_66 = arith.constant 0 : index
    %84 = vector.load %arg4[%c1_63, %c0_64, %c0_65, %c0_66] : memref<2x2x2x128xf32, #tpu.memory_space<vmem>>, vector<1x1x2x128xf32>
    %85 = vector.shape_cast %84 : vector<1x1x2x128xf32> to vector<2x128xf32>
    %86 = vector.shape_cast %83 : vector<2x128xf32> to vector<1x1x2x128xf32>
    tpu.vector_store %arg4[%c1_63, %c0_64, %c0_65, %c0_66], %86 {strides = array<i32>} : memref<2x2x2x128xf32, #tpu.memory_space<vmem>>, vector<1x1x2x128xf32>,
    %c1_67 = arith.constant 1 : index
    %c0_68 = arith.constant 0 : index
    %c0_69 = arith.constant 0 : index
    %c0_70 = arith.constant 0 : index
    %87 = vector.load %arg3[%c1_67, %c0_68, %c0_69, %c0_70] : memref<2x4x2x128xf32, #tpu.memory_space<vmem>>, vector<1x1x2x128xf32>
    %88 = vector.shape_cast %87 : vector<1x1x2x128xf32> to vector<2x128xf32>
    %c4_71 = arith.constant 4 : index
    %89 = memref.load %arg1[%c4_71] : memref<8xf32, #tpu.memory_space<smem>>
    %90 = vector.broadcast %89 : f32 to vector<2x128xf32>
    %91 = arith.mulf %88, %90 : vector<2x128xf32>
    %c1_72 = arith.constant 1 : index
    %c1_73 = arith.constant 1 : index
    %c0_74 = arith.constant 0 : index
    %c0_75 = arith.constant 0 : index
    %92 = vector.load %arg3[%c1_72, %c1_73, %c0_74, %c0_75] : memref<2x4x2x128xf32, #tpu.memory_space<vmem>>, vector<1x1x2x128xf32>
    %93 = vector.shape_cast %92 : vector<1x1x2x128xf32> to vector<2x128xf32>
    %c5_76 = arith.constant 5 : index
    %94 = memref.load %arg1[%c5_76] : memref<8xf32, #tpu.memory_space<smem>>
    %95 = vector.broadcast %94 : f32 to vector<2x128xf32>
    %96 = arith.mulf %93, %95 : vector<2x128xf32>
    %97 = arith.addf %91, %96 : vector<2x128xf32>
    %c1_77 = arith.constant 1 : index
    %c2_78 = arith.constant 2 : index
    %c0_79 = arith.constant 0 : index
    %c0_80 = arith.constant 0 : index
    %98 = vector.load %arg3[%c1_77, %c2_78, %c0_79, %c0_80] : memref<2x4x2x128xf32, #tpu.memory_space<vmem>>, vector<1x1x2x128xf32>
    %99 = vector.shape_cast %98 : vector<1x1x2x128xf32> to vector<2x128xf32>
    %c6_81 = arith.constant 6 : index
    %100 = memref.load %arg1[%c6_81] : memref<8xf32, #tpu.memory_space<smem>>
    %101 = vector.broadcast %100 : f32 to vector<2x128xf32>
    %102 = arith.mulf %99, %101 : vector<2x128xf32>
    %103 = arith.addf %97, %102 : vector<2x128xf32>
    %c1_82 = arith.constant 1 : index
    %c3_83 = arith.constant 3 : index
    %c0_84 = arith.constant 0 : index
    %c0_85 = arith.constant 0 : index
    %104 = vector.load %arg3[%c1_82, %c3_83, %c0_84, %c0_85] : memref<2x4x2x128xf32, #tpu.memory_space<vmem>>, vector<1x1x2x128xf32>
    %105 = vector.shape_cast %104 : vector<1x1x2x128xf32> to vector<2x128xf32>
    %c7_86 = arith.constant 7 : index
    %106 = memref.load %arg1[%c7_86] : memref<8xf32, #tpu.memory_space<smem>>
    %107 = vector.broadcast %106 : f32 to vector<2x128xf32>
    %108 = arith.mulf %105, %107 : vector<2x128xf32>
    %109 = arith.addf %103, %108 : vector<2x128xf32>
    %c1_87 = arith.constant 1 : index
    %110 = memref.load %arg2[%c1_87] : memref<2xf32, #tpu.memory_space<smem>>
    %111 = vector.broadcast %110 : f32 to vector<2x128xf32>
    %112 = arith.addf %109, %111 : vector<2x128xf32>
    %c1_88 = arith.constant 1 : index
    %c1_89 = arith.constant 1 : index
    %c0_90 = arith.constant 0 : index
    %c0_91 = arith.constant 0 : index
    %113 = vector.load %arg4[%c1_88, %c1_89, %c0_90, %c0_91] : memref<2x2x2x128xf32, #tpu.memory_space<vmem>>, vector<1x1x2x128xf32>
    %114 = vector.shape_cast %113 : vector<1x1x2x128xf32> to vector<2x128xf32>
    %115 = vector.shape_cast %112 : vector<2x128xf32> to vector<1x1x2x128xf32>
    tpu.vector_store %arg4[%c1_88, %c1_89, %c0_90, %c0_91], %115 {strides = array<i32>} : memref<2x2x2x128xf32, #tpu.memory_space<vmem>>, vector<1x1x2x128xf32>,
    return
  }
  func.func @transform_0(%arg0: i32) -> i32 {
    %c0_i32 = arith.constant 0 : i32
    %c0_i32_0 = arith.constant 0 : i32
    return %c0_i32 : i32
  }
  func.func @transform_1(%arg0: i32) -> i32 {
    %c0_i32 = arith.constant 0 : i32
    %c0_i32_0 = arith.constant 0 : i32
    return %c0_i32 : i32
  }
  func.func @transform_2(%arg0: i32) -> (i32, i32, i32, i32) {
    %c0_i32 = arith.constant 0 : i32
    %c0_i32_0 = arith.constant 0 : i32
    %c0_i32_1 = arith.constant 0 : i32
    %c0_i32_2 = arith.constant 0 : i32
    return %c0_i32, %c0_i32_0, %arg0, %c0_i32_1 : i32, i32, i32, i32
  }
  func.func @transform_3(%arg0: i32) -> (i32, i32, i32, i32) {
    %c0_i32 = arith.constant 0 : i32
    %c0_i32_0 = arith.constant 0 : i32
    %c0_i32_1 = arith.constant 0 : i32
    %c0_i32_2 = arith.constant 0 : i32
    return %c0_i32, %c0_i32_0, %arg0, %c0_i32_1 : i32, i32, i32, i32
  }
}

</mosaic_0001>

<llo_original>
// kernel: tpu_custom_call.1
$region0: #{tpu_custom_call.1}
  #allocation0 [shape = 'u32[]', space=smem, size = 0x4, offset = 0x4, fixed_abs, tag = 'smem constant byte address 0x4 - core index']
  #allocation1 [shape = 'u32[72,128]{1,0:T(1,128)}', space=vmem, size = 0x9000, scoped, tag = 'internal scratch']
  %s0 = inlined_call_operand.hbm [shape: f32[8], index: 0, kind: input, shape index: {}]
  %s1 = inlined_call_operand.hbm [shape: f32[2], index: 1, kind: input, shape index: {}]
  %s2 = inlined_call_operand.hbm [shape: f32[2,4,2,128], index: 2, kind: input, shape index: {}]
  %s3 = inlined_call_operand.hbm [shape: f32[2,2,2,128], index: 3, kind: output, shape index: {}]
  %s4 = sld [smem:[#allocation0]]
  $region34: #{tpu_custom_call.1} parent=0
    _
  %s6 = ssub.s32 1, %s4
  %s7 = scalar_select 0, %s6, %s4
  $region1: #{tpu_custom_call.1} parent=0
    #allocation2 [shape = 'u8[512]{0}', space=smem, size = 0x200, scoped, tag = 'input window, operand 0, single buffered']
    #allocation3 [shape = 's32[1]{0}', space=sflag, size = 0x4, scoped, tag = 'scoped memory for tpu_custom_call.1']
    #allocation4 [shape = 's32[1]{0}', space=sflag, size = 0x4, scoped, tag = 'scoped memory for tpu_custom_call.1']
    #allocation5 [shape = 's32[1]{0}', space=sflag, size = 0x4, scoped, tag = 'scoped memory for tpu_custom_call.1']
    #allocation6 [shape = 'u8[512]{0}', space=smem, size = 0x200, scoped, tag = 'input window, operand 1, single buffered']
    #allocation7 [shape = 's32[1]{0}', space=sflag, size = 0x4, scoped, tag = 'scoped memory for tpu_custom_call.1']
    #allocation8 [shape = 'u8[8192]{0}', space=vmem, size = 0x2000, scoped, tag = 'input window, operand 2, single buffered']
    #allocation9 [shape = 'u8[4096]{0}', space=vmem, size = 0x1000, scoped, tag = 'output window, operand 0, single buffered']
    %8 = vsyncpa [#allocation5], 0
    %9 = vsyncpa [#allocation7], 0
    %10 = vsyncpa [#allocation3], 0
    %11 = vsyncpa [#allocation4], 0
    // Predicated region
    $region2: #{tpu_custom_call.1} parent=1 // pred_check
      _
    $region3: #{tpu_custom_call.1} parent=1 // pred_check_branch
      %13 = sbr.rel (0) target = $region5
    $region4: #{tpu_custom_call.1} parent=1 // pred_region
      %15 = vsyncadd [#allocation5], 0
      %s17 = sshll.u32 %s0, 4
      %s18 = int_to_ptr.hbm [resolvable:$true] %s17
      %20 = dma.hbm_to_smem %s18, 16, [#allocation2], [#allocation5]
    $region5: #{tpu_custom_call.1} parent=1 // pred_fallthru
      _
    // Predicated region
    $region6: #{tpu_custom_call.1} parent=1 // pred_check
      _
    $region7: #{tpu_custom_call.1} parent=1 // pred_check_branch
      %22 = sbr.rel (0) target = $region9
    $region8: #{tpu_custom_call.1} parent=1 // pred_region
      %24 = vsyncadd [#allocation7], 0
      %s26 = sshll.u32 %s1, 4
      %s27 = int_to_ptr.hbm [resolvable:$true] %s26
      %29 = dma.hbm_to_smem %s27, 16, [#allocation6], [#allocation7]
    $region9: #{tpu_custom_call.1} parent=1 // pred_fallthru
      _
    // Predicated region
    $region10: #{tpu_custom_call.1} parent=1 // pred_check
      _
    $region11: #{tpu_custom_call.1} parent=1 // pred_check_branch
      %31 = sbr.rel (0) target = $region13
    $region12: #{tpu_custom_call.1} parent=1 // pred_region
      %33 = vsyncadd [#allocation3], 0
      %s34 = sshll.u32 %s2, 4
      %s35 = int_to_ptr.hbm [resolvable:$true] %s34
      %s36 = sshll.u32 [#allocation8], 4
      %s37 = int_to_ptr.vmem [resolvable:$true] %s36
      %42 = dma.hbm_to_vmem [thread:$0]  %s35, 256, %s37, [#allocation3], 32, 32, 2
    $region13: #{tpu_custom_call.1} parent=1 // pred_fallthru
      _
    // Predicated region
    $region14: #{tpu_custom_call.1} parent=1 // pred_check
      _
    $region15: #{tpu_custom_call.1} parent=1 // pred_check_branch
      %44 = sbr.rel (0) target = $region17
    $region16: #{tpu_custom_call.1} parent=1 // pred_region
      %46 = dma.done [#allocation5], 16
    $region17: #{tpu_custom_call.1} parent=1 // pred_fallthru
      _
    // Predicated region
    $region18: #{tpu_custom_call.1} parent=1 // pred_check
      _
    $region19: #{tpu_custom_call.1} parent=1 // pred_check_branch
      %48 = sbr.rel (0) target = $region21
    $region20: #{tpu_custom_call.1} parent=1 // pred_region
      %50 = dma.done [#allocation7], 16
    $region21: #{tpu_custom_call.1} parent=1 // pred_fallthru
      _
    // Predicated region
    $region22: #{tpu_custom_call.1} parent=1 // pred_check
      _
    $region23: #{tpu_custom_call.1} parent=1 // pred_check_branch
      %52 = sbr.rel (0) target = $region25
    $region24: #{tpu_custom_call.1} parent=1 // pred_region
      %54 = dma.done [#allocation3], 256
    $region25: #{tpu_custom_call.1} parent=1 // pred_fallthru
      _
    %55 = sfence
    %v56 = vld [vmem:[#allocation8] sm:$0x3]
    %s57 = sld [smem:[#allocation2]]
    %v58 = vstv %s57
    %v59 = vmul.f32 %v56, %v58
    %s60 = scalar_lea.vmem [#allocation8], 2
    %v61 = vld [vmem:[%s60] sm:$0x3]
    %s62 = sld [smem:[#allocation2 + $0x1]]
    %v63 = vstv %s62
    %v64 = vmul.f32 %v61, %v63
    %v65 = vadd.f32 %v59, %v64
    %s66 = scalar_lea.vmem [#allocation8], 4
    %v67 = vld [vmem:[%s66] sm:$0x3]
    %s68 = sld [smem:[#allocation2 + $0x2]]
    %v69 = vstv %s68
    %v70 = vmul.f32 %v67, %v69
    %v71 = vadd.f32 %v65, %v70
    %s72 = scalar_lea.vmem [#allocation8], 6
    %v73 = vld [vmem:[%s72] sm:$0x3]
    %s74 = sld [smem:[#allocation2 + $0x3]]
    %v75 = vstv %s74
    %v76 = vmul.f32 %v73, %v75
    %v77 = vadd.f32 %v71, %v76
    %s78 = sld [smem:[#allocation6]]
    %v79 = vstv %s78
    %v80 = vadd.f32 %v77, %v79
    %81 = vst [vmem:[#allocation9] sm:$0x3] %v80
    %v82 = vld [vmem:[#allocation8] sm:$0x3]
    %s83 = sld [smem:[#allocation2 + $0x4]]
    %v84 = vstv %s83
    %v85 = vmul.f32 %v82, %v84
    %v86 = vld [vmem:[%s60] sm:$0x3]
    %s87 = sld [smem:[#allocation2 + $0x5]]
    %v88 = vstv %s87
    %v89 = vmul.f32 %v86, %v88
    %v90 = vadd.f32 %v85, %v89
    %v91 = vld [vmem:[%s66] sm:$0x3]
    %s92 = sld [smem:[#allocation2 + $0x6]]
    %v93 = vstv %s92
    %v94 = vmul.f32 %v91, %v93
    %v95 = vadd.f32 %v90, %v94
    %v96 = vld [vmem:[%s72] sm:$0x3]
    %s97 = sld [smem:[#allocation2 + $0x7]]
    %v98 = vstv %s97
    %v99 = vmul.f32 %v96, %v98
    %v100 = vadd.f32 %v95, %v99
    %s101 = sld [smem:[#allocation6 + $0x1]]
    %v102 = vstv %s101
    %v103 = vadd.f32 %v100, %v102
    %s104 = scalar_lea.vmem [#allocation9], 2
    %105 = vst [vmem:[%s104] sm:$0x3] %v103
    %s106 = scalar_lea.vmem [#allocation8], 8
    %v107 = vld [vmem:[%s106] sm:$0x3]
    %s108 = sld [smem:[#allocation2]]
    %v109 = vstv %s108
    %v110 = vmul.f32 %v107, %v109
    %s111 = scalar_lea.vmem [#allocation8], 10
    %v112 = vld [vmem:[%s111] sm:$0x3]
    %s113 = sld [smem:[#allocation2 + $0x1]]
    %v114 = vstv %s113
    %v115 = vmul.f32 %v112, %v114
    %v116 = vadd.f32 %v110, %v115
    %s117 = scalar_lea.vmem [#allocation8], 12
    %v118 = vld [vmem:[%s117] sm:$0x3]
    %s119 = sld [smem:[#allocation2 + $0x2]]
    %v120 = vstv %s119
    %v121 = vmul.f32 %v118, %v120
    %v122 = vadd.f32 %v116, %v121
    %s123 = scalar_lea.vmem [#allocation8], 14
    %v124 = vld [vmem:[%s123] sm:$0x3]
    %s125 = sld [smem:[#allocation2 + $0x3]]
    %v126 = vstv %s125
    %v127 = vmul.f32 %v124, %v126
    %v128 = vadd.f32 %v122, %v127
    %s129 = sld [smem:[#allocation6]]
    %v130 = vstv %s129
    %v131 = vadd.f32 %v128, %v130
    %s132 = scalar_lea.vmem [#allocation9], 4
    %133 = vst [vmem:[%s132] sm:$0x3] %v131
    %v134 = vld [vmem:[%s106] sm:$0x3]
    %s135 = sld [smem:[#allocation2 + $0x4]]
    %v136 = vstv %s135
    %v137 = vmul.f32 %v134, %v136
    %v138 = vld [vmem:[%s111] sm:$0x3]
    %s139 = sld [smem:[#allocation2 + $0x5]]
    %v140 = vstv %s139
    %v141 = vmul.f32 %v138, %v140
    %v142 = vadd.f32 %v137, %v141
    %v143 = vld [vmem:[%s117] sm:$0x3]
    %s144 = sld [smem:[#allocation2 + $0x6]]
    %v145 = vstv %s144
    %v146 = vmul.f32 %v143, %v145
    %v147 = vadd.f32 %v142, %v146
    %v148 = vld [vmem:[%s123] sm:$0x3]
    %s149 = sld [smem:[#allocation2 + $0x7]]
    %v150 = vstv %s149
    %v151 = vmul.f32 %v148, %v150
    %v152 = vadd.f32 %v147, %v151
    %s153 = sld [smem:[#allocation6 + $0x1]]
    %v154 = vstv %s153
    %v155 = vadd.f32 %v152, %v154
    %s156 = scalar_lea.vmem [#allocation9], 6
    %157 = vst [vmem:[%s156] sm:$0x3] %v155
    // Predicated region
    $region26: #{tpu_custom_call.1} parent=1 // pred_check
      _
    $region27: #{tpu_custom_call.1} parent=1 // pred_check_branch
      %159 = sbr.rel (0) target = $region29
    $region28: #{tpu_custom_call.1} parent=1 // pred_region
      %161 = vsyncadd [#allocation4], 0
      %s162 = sshll.u32 [#allocation9], 4
      %s163 = int_to_ptr.vmem [resolvable:$true] %s162
      %s164 = sshll.u32 %s3, 4
      %s165 = int_to_ptr.hbm [resolvable:$true] %s164
      %170 = dma.vmem_to_hbm [thread:$0]  %s163, 128, %s165, [#allocation4], 32, 32, 2
    $region29: #{tpu_custom_call.1} parent=1 // pred_fallthru
      _
    // Predicated region
    $region30: #{tpu_custom_call.1} parent=1 // pred_check
      _
    $region31: #{tpu_custom_call.1} parent=1 // pred_check_branch
      %172 = sbr.rel (0) target = $region33
    $region32: #{tpu_custom_call.1} parent=1 // pred_region
      %174 = dma.done [#allocation4], 128
    $region33: #{tpu_custom_call.1} parent=1 // pred_fallthru
      _
    %175 = vsyncpa [#allocation3], 1
    %176 = vsyncpa [#allocation4], 1
    %177 = vsyncpa [#allocation5], 1
    %178 = vsyncpa [#allocation7], 1

</llo_original>
